<compile_context>
chip_gen: v5e
topology: v5e:2x2
jax: 0.10.0
libtpu: 0.0.40
codegen_flags: <defaults>
</compile_context>

<pallas_src>
import functools
import math

import jax
import jax.numpy as jnp
from jax.experimental import pallas as pl
from jax.experimental.pallas import tpu as pltpu


# ----------------------------------------------------------------------------
# Kernels
# ----------------------------------------------------------------------------
def _resize_norm_kernel(multi_k, acc_in_out, contract_h_first,
                        mean_ref, std_ref, img_ref, a_ref, b_ref,
                        rsh_ref, csw_ref, out_ref, *scratch):
    """grid = (N*C, H-strips, K).

    Per (nc, s, k) step (strip of TH output rows):
      contract_h_first:  part = (Wh[strip] @ x[:, k_tile]) @ WwT[k_tile, :]
      else            :  part = Wh[strip, k_tile] @ (x[k_tile, :] @ WwT)
    Accumulated over k (in the output block itself when it is f32), with the
    normalization applied as an epilogue on the last k.
    """
    nc = pl.program_id(0)
    k = pl.program_id(2)

    xb = img_ref[0].astype(jnp.bfloat16)
    if contract_h_first:
        tmp = jnp.dot(a_ref[...], xb, preferred_element_type=jnp.float32)
        part = jnp.dot(tmp.astype(jnp.bfloat16), b_ref[...],
                       preferred_element_type=jnp.float32)
    else:
        tmp = jnp.dot(xb, b_ref[...], preferred_element_type=jnp.float32)
        part = jnp.dot(a_ref[...], tmp.astype(jnp.bfloat16),
                       preferred_element_type=jnp.float32)

    def finalize(acc):
        inv_std = 1.0 / std_ref[nc]
        # (Wh @ ones @ WwT)[p, q] = rowsum(Wh)[p] * colsum(WwT)[q]
        corr = rsh_ref[...] * csw_ref[...]               # (TH,1)*(1,W_pad)
        return inv_std * acc - (mean_ref[nc] * inv_std) * corr

    if not multi_k:
        out_ref[0] = finalize(part).astype(out_ref.dtype)
    else:
        if acc_in_out:                                   # f32 output: accumulate in place
            @pl.when(k == 0)
            def _():
                out_ref[0] = jnp.zeros_like(part)

            out_ref[0] = out_ref[0] + part

            @pl.when(k == pl.num_programs(2) - 1)
            def _():
                out_ref[0] = finalize(out_ref[0]).astype(out_ref.dtype)
        else:                                            # non-f32 output: f32 scratch
            acc_ref = scratch[0]

            @pl.when(k == 0)
            def _():
                acc_ref[...] = jnp.zeros_like(acc_ref)

            acc_ref[...] += part

            @pl.when(k == pl.num_programs(2) - 1)
            def _():
                out_ref[0] = finalize(acc_ref[...]).astype(out_ref.dtype)


def _norm_pad_kernel(h_in, w_in, mean_ref, std_ref, img_ref, out_ref):
    """No-resize fast path: normalize and zero-pad one plane (VPU only)."""
    nc = pl.program_id(0)
    inv_std = 1.0 / std_ref[nc]
    x = img_ref[0].astype(jnp.float32)
    normed = (x - mean_ref[nc]) * inv_std
    h_pad, w_pad = out_ref.shape[1], out_ref.shape[2]
    if (h_in, w_in) != (h_pad, w_pad):
        out_ref[0] = jnp.zeros((h_pad, w_pad), out_ref.dtype)
        out_ref[0, :h_in, :w_in] = normed.astype(out_ref.dtype)
    else:
        out_ref[0] = normed.astype(out_ref.dtype)


# ----------------------------------------------------------------------------
# Tiling heuristics
# ----------------------------------------------------------------------------
def _vmem_budget_bytes():
    cap = 64 << 20                       # conservative fallback (v7x-sized)
    try:
        info = pltpu.get_tpu_info()
        cap = int(getattr(info, "vmem_capacity_bytes", cap))
    except Exception:
        pass
    return max((cap * 3) // 4, 16 << 20)  # ~48 MiB v7x, ~96 MiB v5e/v6e


def _strip_candidates(h_pad):
    cands = [th for th in range(h_pad, 0, -1)
             if h_pad % th == 0 and (th % 8 == 0 or th == h_pad)]
    return cands or [h_pad]


def _pick_strip_rows(h_pad, w_pad, out_isz, budget):
    cands = _strip_candidates(h_pad)
    for th in cands:
        # double-buffered output strip + f32 accumulator / epilogue temp
        if th * w_pad * (2 * out_isz + 8) <= budget // 3:
            return th
    return cands[-1]


def _tk_candidates(k_total, max_tile_k):
    cands = []
    if max_tile_k is None or k_total <= max_tile_k:
        cands.append(k_total)            # prefer num_k == 1
    for t in (2048, 1536, 1024, 768, 512, 384, 256, 128):
        if t < k_total and (max_tile_k is None or t <= max_tile_k):
            cands.append(t)
    return cands or [k_total]


def _resize_footprint(contract_h_first, h_in, w_in, th, tk, w_pad, in_isz, out_isz):
    if contract_h_first:
        per_buf = (h_in * tk * in_isz + th * h_in * 2 + tk * w_pad * 2
                   + th * w_pad * out_isz + (th + w_pad) * 4)
        tmp = th * tk * 6                               # f32 intermediate + bf16 recast
    else:
        per_buf = (tk * w_in * in_isz + th * tk * 2 + w_in * w_pad * 2
                   + th * w_pad * out_isz + (th + w_pad) * 4)
        tmp = tk * w_pad * 6
    acc = th * w_pad * 4 if out_isz != 4 else 0
    return 2 * per_buf + tmp + acc + 3 * th * w_pad * 4 + (2 << 20)


# ----------------------------------------------------------------------------
# Per-bucket fused calls (jit-cached per input shape)
# ----------------------------------------------------------------------------
@functools.partial(jax.jit, static_argnames=(
    "nh", "nw", "scale", "h_pad", "w_pad", "vmem_budget", "max_tile_k"))
def _resize_bucket(imgs, mean, std, *, nh, nw, scale, h_pad, w_pad,
                   vmem_budget, max_tile_k):
    """Normalize + bilinear-resize + zero-pad a (N_b, C, H_in, W_in) bucket."""
    n_b, c, h_in, w_in = imgs.shape
    nc = n_b * c
    out_dtype = imgs.dtype if jnp.issubdtype(imgs.dtype, jnp.floating) else jnp.float32
    out_isz = jnp.dtype(out_dtype).itemsize
    in_isz = jnp.dtype(imgs.dtype).itemsize

    # H_pad row strips (keeps resident output path small on v7x; S==1 otherwise).
    th = _pick_strip_rows(h_pad, w_pad, out_isz, vmem_budget)
    n_strips = h_pad // th

    # Cheaper matmul association order (account for strip recompute in w-first).
    cost_h = h_pad * w_in * (h_in + w_pad)              # (Wh @ x) @ WwT
    cost_w = w_pad * h_in * (n_strips * w_in + h_pad)   # Wh @ (x @ WwT)
    contract_h_first = cost_h <= cost_w

    k_total = w_in if contract_h_first else h_in
    tk = None
    cands = _tk_candidates(k_total, max_tile_k)
    for t in cands:
        if _resize_footprint(contract_h_first, h_in, w_in, th, t, w_pad,
                             in_isz, out_isz) <= vmem_budget:
            tk = t
            break
    if tk is None:
        tk = cands[-1]
    num_k = pl.cdiv(k_total, tk)
    k_pad = num_k * tk

    # Interpolation matrices; rows/cols past the resized extent are zero, so
    # the stride-divisible zero padding falls out of the matmul for free.
    wh = _interp_matrix(nh, h_in, scale, h_pad)               # (h_pad, h_in)
    wwt = _interp_matrix(nw, w_in, scale, w_pad).T            # (w_in, w_pad)
    wh_b = wh.astype(jnp.bfloat16)
    wwt_b = wwt.astype(jnp.bfloat16)
    rs_h = wh_b.astype(jnp.float32).sum(axis=1, keepdims=True)   # (h_pad, 1)
    cs_w = wwt_b.astype(jnp.float32).sum(axis=0, keepdims=True)  # (1, w_pad)

    x = imgs.reshape(nc, h_in, w_in)
    if k_pad != k_total:
        # Zero-pad the grid-tiled contraction dim so every K tile is full; the
        # matching interp-matrix rows/cols are zero, so the result is exact.
        if contract_h_first:
            x = jnp.pad(x, ((0, 0), (0, 0), (0, k_pad - k_total)))
            wwt_b = jnp.pad(wwt_b, ((0, k_pad - k_total), (0, 0)))
        else:
            x = jnp.pad(x, ((0, 0), (0, k_pad - k_total), (0, 0)))
            wh_b = jnp.pad(wh_b, ((0, 0), (0, k_pad - k_total)))

    if contract_h_first:
        img_spec = pl.BlockSpec((1, h_in, tk), lambda n, s, k: (n, 0, k))
        a_spec = pl.BlockSpec((th, h_in), lambda n, s, k: (s, 0))
        b_spec = pl.BlockSpec((tk, w_pad), lambda n, s, k: (k, 0))
    else:
        img_spec = pl.BlockSpec((1, tk, w_in), lambda n, s, k: (n, k, 0))
        a_spec = pl.BlockSpec((th, tk), lambda n, s, k: (s, k))
        b_spec = pl.BlockSpec((w_in, w_pad), lambda n, s, k: (0, 0))

    multi_k = num_k > 1
    acc_in_out = multi_k and jnp.dtype(out_dtype) == jnp.dtype(jnp.float32)
    use_scratch = multi_k and not acc_in_out
    scratch = [pltpu.VMEM((th, w_pad), jnp.float32)] if use_scratch else []

    mean_nc = jnp.tile(mean.astype(jnp.float32), n_b)      # (N_b*C,)
    std_nc = jnp.tile(std.astype(jnp.float32), n_b)

    kernel = functools.partial(_resize_norm_kernel, multi_k, acc_in_out,
                               contract_h_first)
    out = pl.pallas_call(
        kernel,
        out_shape=jax.ShapeDtypeStruct((nc, h_pad, w_pad), out_dtype),
        grid=(nc, n_strips, num_k),
        in_specs=[
            pl.BlockSpec(memory_space=pltpu.MemorySpace.SMEM),   # mean (NC,)
            pl.BlockSpec(memory_space=pltpu.MemorySpace.SMEM),   # std  (NC,)
            img_spec,                                            # image K-tile
            a_spec,                                              # Wh strip
            b_spec,                                              # Ww^T
            pl.BlockSpec((th, 1), lambda n, s, k: (s, 0)),       # rowsum(Wh)
            pl.BlockSpec((1, w_pad), lambda n, s, k: (0, 0)),    # colsum(Ww^T)
        ],
        out_specs=pl.BlockSpec((1, th, w_pad), lambda n, s, k: (n, s, 0)),
        scratch_shapes=scratch,
        compiler_params=pltpu.CompilerParams(
            dimension_semantics=("parallel", "parallel", "arbitrary"),
            vmem_limit_bytes=int(vmem_budget)),
    )(mean_nc, std_nc, x, wh_b, wwt_b, rs_h, cs_w)
    return out.reshape(n_b, c, h_pad, w_pad)


@functools.partial(jax.jit, static_argnames=("h_pad", "w_pad", "vmem_budget"))
def _pad_bucket(imgs, mean, std, *, h_pad, w_pad, vmem_budget):
    """No-resize fast path: normalize + zero-pad a (N_b, C, H, W) bucket."""
    # TODO(synk): strip-tile this path too for very large planes on v7x.
    n_b, c, h_in, w_in = imgs.shape
    nc = n_b * c
    out_dtype = imgs.dtype if jnp.issubdtype(imgs.dtype, jnp.floating) else jnp.float32
    x = imgs.reshape(nc, h_in, w_in)
    mean_nc = jnp.tile(mean.astype(jnp.float32), n_b)
    std_nc = jnp.tile(std.astype(jnp.float32), n_b)
    kernel = functools.partial(_norm_pad_kernel, h_in, w_in)
    out = pl.pallas_call(
        kernel,
        out_shape=jax.ShapeDtypeStruct((nc, h_pad, w_pad), out_dtype),
        grid=(nc,),
        in_specs=[
            pl.BlockSpec(memory_space=pltpu.MemorySpace.SMEM),
            pl.BlockSpec(memory_space=pltpu.MemorySpace.SMEM),
            pl.BlockSpec((1, h_in, w_in), lambda n: (n, 0, 0)),
        ],
        out_specs=pl.BlockSpec((1, h_pad, w_pad), lambda n: (n, 0, 0)),
        compiler_params=pltpu.CompilerParams(
            dimension_semantics=("parallel",),
            vmem_limit_bytes=int(vmem_budget)),
    )(mean_nc, std_nc, x)
    return out.reshape(n_b, c, h_pad, w_pad)


# ----------------------------------------------------------------------------
# Host-side glue: PyTorch bilinear (align_corners=False, scale_factor given)
# interpolation matrices, and the resize-parameter logic.
# ----------------------------------------------------------------------------
def _interp_matrix(out_size, in_size, scale_factor, pad_to):
    """Rows >= out_size are zero -> output is zero-padded to `pad_to` for free.

    Matches PyTorch's coordinate mapping when scale_factor is passed to
    F.interpolate: src = (dst + 0.5) / scale - 0.5 (pre-floor scale), clamped
    at the low side; equal in/out sizes are an exact passthrough.
    """
    dst = jnp.arange(pad_to, dtype=jnp.float32)
    valid = dst < out_size
    if out_size == in_size:
        w = ((dst[:, None] == jnp.arange(in_size, dtype=jnp.float32)[None, :])
             & valid[:, None]).astype(jnp.float32)
        return w
    src = (dst + 0.5) / jnp.float32(scale_factor) - 0.5
    src = jnp.maximum(src, 0.0)
    lo = jnp.minimum(jnp.floor(src).astype(jnp.int32), in_size - 1)
    hi = jnp.minimum(lo + 1, in_size - 1)
    frac = src - lo.astype(jnp.float32)
    validf = valid.astype(jnp.float32)
    rows = jnp.arange(pad_to)
    w = jnp.zeros((pad_to, in_size), dtype=jnp.float32)
    w = w.at[rows, lo].add((1.0 - frac) * validf)
    w = w.at[rows, hi].add(frac * validf)
    return w


def _resize_params(h, w, size, max_size_limit):
    min_s = float(min(h, w))
    max_s = float(max(h, w))
    if min_s > size and max_s < max_size_limit:
        return 1.0, h, w, False                     # early return: no resize
    scale = size / min_s
    if max_s * scale > max_size_limit:
        scale = max_size_limit / max_s
    return scale, int(math.floor(h * scale)), int(math.floor(w * scale)), True


class ImageList:
    def __init__(self, tensors, image_sizes):
        self.tensors = tensors
        self.image_sizes = image_sizes


class GeneralizedYOLOTransformPallas:
    def __init__(self, min_size, max_size, image_mean, image_std,
                 downsample_factor=32, max_tile_k=None):
        if not isinstance(min_size, (list, tuple)):
            min_size = (min_size,)
        assert max_tile_k is None or (max_tile_k >= 128 and max_tile_k % 128 == 0)
        self.min_size = min_size
        self.max_size = max_size
        self.image_mean = jnp.asarray(image_mean, jnp.float32)
        self.image_std = jnp.asarray(image_std, jnp.float32)
        self.size_divisible = downsample_factor
        self.max_tile_k = max_tile_k                  # optional debug cap on K tile
        self.vmem_budget = _vmem_budget_bytes()
        # TODO(synk): PyTorch training mode picks size = random.choice(min_size)
        # with host RNG; we implement the eval path (min_size[-1]).
        self.training = False

    def __call__(self, images, targets=None):
        if hasattr(images, "ndim") and not isinstance(images, (list, tuple)):
            if images.ndim != 4:
                raise ValueError("images must be 4d [N,C,H,W] or a list of 3d [C,H,W]")
        images = [img for img in images]
        for img in images:
            if img.ndim != 3:
                raise ValueError("each image must be a 3d tensor [C,H,W]")

        size = float(self.min_size[-1])
        n = len(images)
        params = []
        for img in images:
            _, h, w = img.shape
            scale, nh, nw, did_resize = _resize_params(h, w, size, self.max_size)
            params.append((scale, nh, nw, did_resize, h, w))

        stride = self.size_divisible
        h_pad = int(math.ceil(max(p[1] for p in params) / stride) * stride)
        w_pad = int(math.ceil(max(p[2] for p in params) / stride) * stride)
        # TODO(synk): optionally round w_pad up to a multiple of 128 for
        # full-width vst epilogue stores when the downstream model tolerates it.

        # Bucket images by input shape (identical interp matrices): one
        # pallas_call per bucket, grid (N_bucket*C, strips, K).
        buckets = {}
        for i, img in enumerate(images):
            key = (tuple(img.shape), str(img.dtype))
            buckets.setdefault(key, []).append(i)

        outs, order = [], []
        for key, idxs in buckets.items():
            scale, nh, nw, did_resize, h, w = params[idxs[0]]
            stacked = jnp.stack([images[i] for i in idxs])    # (N_b, C, H, W)
            if did_resize:
                out_b = _resize_bucket(
                    stacked, self.image_mean, self.image_std,
                    nh=nh, nw=nw, scale=scale, h_pad=h_pad, w_pad=w_pad,
                    vmem_budget=self.vmem_budget, max_tile_k=self.max_tile_k)
            else:
                out_b = _pad_bucket(
                    stacked, self.image_mean, self.image_std,
                    h_pad=h_pad, w_pad=w_pad, vmem_budget=self.vmem_budget)
            outs.append(out_b)
            order.extend(idxs)

        if len(outs) == 1:
            batched = outs[0]
        else:
            cat = jnp.concatenate(outs, axis=0)
            if order == list(range(n)):
                batched = cat
            else:
                inv = [0] * n
                for pos, i in enumerate(order):
                    inv[i] = pos
                batched = jnp.take(cat, jnp.asarray(inv, jnp.int32), axis=0)

        image_sizes = [(params[i][1], params[i][2]) for i in range(n)]

        out_targets = None
        if targets is not None:
            out_targets = []
            for i, t in enumerate(targets):
                scale, nh, nw, did_resize, h, w = params[i]
                if did_resize:
                    rh = float(nh) / float(h)
                    rw = float(nw) / float(w)
                    ratios = jnp.asarray([rw, rh, rw, rh], jnp.float32)
                    boxes = t["boxes"] * ratios[None, :]
                else:
                    boxes = t["boxes"]
                out_targets.append({"boxes": boxes, "labels": t["labels"]})

        return ImageList(batched, image_sizes), out_targets


# ----------------------------------------------------------------------------
# Demo / self-check
# ----------------------------------------------------------------------------
if __name__ == "__main__":
    key = jax.random.PRNGKey(0)
    ks = jax.random.split(key, 6)
    images = [
        jax.random.uniform(ks[0], (3, 16, 16), jnp.float32),    # 2x upscale
        jax.random.uniform(ks[1], (3, 16, 16), jnp.float32),    # same bucket as #0
        jax.random.uniform(ks[2], (3, 24, 20), jnp.float32),    # 1.6x upscale
        jax.random.uniform(ks[3], (3, 40, 16), jnp.float32),    # max_size-clamped
        jax.random.uniform(ks[4], (3, 40, 48), jnp.float32),    # no-resize fast path
        jax.random.uniform(ks[5], (3, 250, 250), jnp.float32),  # downscale, K-tiled
    ]
    targets = [
        {"boxes": jnp.asarray([[1.0, 2.0, 10.0, 12.0]], jnp.float32),
         "labels": jnp.asarray([1], jnp.int32)},
        {"boxes": jnp.asarray([[3.0, 4.0, 9.0, 11.0]], jnp.float32),
         "labels": jnp.asarray([1], jnp.int32)},
        {"boxes": jnp.asarray([[0.0, 0.0, 15.0, 20.0]], jnp.float32),
         "labels": jnp.asarray([2], jnp.int32)},
        {"boxes": jnp.asarray([[2.0, 3.0, 12.0, 30.0]], jnp.float32),
         "labels": jnp.asarray([3], jnp.int32)},
        {"boxes": jnp.asarray([[5.0, 5.0, 30.0, 35.0]], jnp.float32),
         "labels": jnp.asarray([4], jnp.int32)},
        {"boxes": jnp.asarray([[10.0, 10.0, 200.0, 150.0]], jnp.float32),
         "labels": jnp.asarray([5], jnp.int32)},
    ]

    transform = GeneralizedYOLOTransformPallas(
        min_size=32, max_size=64,
        image_mean=[0.485, 0.456, 0.406],
        image_std=[0.229, 0.224, 0.225],
        downsample_factor=32,
        max_tile_k=128)   # small K-tile cap so the demo exercises the accumulator path

    image_list, targets_out = transform(images, targets)
    batched = jax.block_until_ready(image_list.tensors)

    # Plain-JAX f32 reference (independent of the kernel's bf16 weights / folded
    # normalization / fast-path dispatch); bf16 operands give ~1e-2 abs error.
    size = float(transform.min_size[-1])
    stride = transform.size_divisible
    prm = [_resize_params(im.shape[1], im.shape[2], size, transform.max_size)
           for im in images]
    h_pad = int(math.ceil(max(p[1] for p in prm) / stride) * stride)
    w_pad = int(math.ceil(max(p[2] for p in prm) / stride) * stride)
    mean = transform.image_mean
    std = transform.image_std
    for i, img in enumerate(images):
        scale, nh, nw, _ = prm[i]
        wh = _interp_matrix(nh, img.shape[1], scale, h_pad)
        wwt = _interp_matrix(nw, img.shape[2], scale, w_pad).T
        norm = (img - mean[:, None, None]) / std[:, None, None]
        ref = jnp.einsum('ph,chw,wq->cpq', wh, norm, wwt)
        assert jnp.allclose(batched[i], ref, atol=5e-2, rtol=5e-2), \
            f"mismatch on image {i}: max err " \
            f"{float(jnp.max(jnp.abs(batched[i] - ref)))}"

    assert batched.shape == (6, 3, 64, 64), batched.shape
    assert image_list.image_sizes == [(32, 32), (32, 32), (38, 32), (64, 25),
                                      (40, 48), (32, 32)], image_list.image_sizes
    # image 0 is a clean 2x resize -> boxes scale by exactly 2
    assert jnp.allclose(targets_out[0]["boxes"], targets[0]["boxes"] * 2.0)
    # image 4 is the no-resize fast path -> boxes unchanged
    assert jnp.allclose(targets_out[4]["boxes"], targets[4]["boxes"])
    jax.block_until_ready(targets_out[-1]["boxes"])
    print("KERNEL_OK")
</pallas_src>

<mosaic_0001>
module attributes {stable_mosaic.version = 11 : i64} {
  func.func @_resize_norm_kernel(%arg0: i32, %arg1: i32, %arg2: i32, %arg3: memref<6xf32, #tpu.memory_space<smem>>, %arg4: memref<6xf32, #tpu.memory_space<smem>>, %arg5: memref<1x16x16xf32, #tpu.memory_space<vmem>>, %arg6: memref<64x16xbf16, #tpu.memory_space<vmem>>, %arg7: memref<16x64xbf16, #tpu.memory_space<vmem>>, %arg8: memref<64x1xf32, #tpu.memory_space<vmem>>, %arg9: memref<1x64xf32, #tpu.memory_space<vmem>>, %arg10: memref<1x64x64xf32, #tpu.memory_space<vmem>>) attributes {dimension_semantics = [#tpu.dimension_semantics<parallel>, #tpu.dimension_semantics<parallel>, #tpu.dimension_semantics<arbitrary>], iteration_bounds = array<i64: 6, 1, 1>, scalar_prefetch = 0 : i64, scratch_operands = 0 : i64, tpu.core_type = #tpu.core_type<tc>, window_params = [{transform_indices = @transform_0, window_bounds = array<i64: 6>}, {transform_indices = @transform_1, window_bounds = array<i64: 6>}, {transform_indices = @transform_2, window_bounds = array<i64: 1, 16, 16>}, {transform_indices = @transform_3, window_bounds = array<i64: 64, 16>}, {transform_indices = @transform_4, window_bounds = array<i64: 16, 64>}, {transform_indices = @transform_5, window_bounds = array<i64: 64, 1>}, {pipeline_mode = #tpu.pipeline_mode<synchronous>, transform_indices = @transform_6, window_bounds = array<i64: 1, 64>}, {transform_indices = @transform_7, window_bounds = array<i64: 1, 64, 64>}]} {
    %c0 = arith.constant 0 : index
    %c0_0 = arith.constant 0 : index
    %c0_1 = arith.constant 0 : index
    %0 = vector.load %arg5[%c0, %c0_0, %c0_1] : memref<1x16x16xf32, #tpu.memory_space<vmem>>, vector<1x16x16xf32>
    %1 = vector.shape_cast %0 : vector<1x16x16xf32> to vector<16x16xf32>
    %2 = arith.truncf %1 : vector<16x16xf32> to vector<16x16xbf16>
    %c0_2 = arith.constant 0 : index
    %c0_3 = arith.constant 0 : index
    %3 = vector.load %arg6[%c0_2, %c0_3] : memref<64x16xbf16, #tpu.memory_space<vmem>>, vector<64x16xbf16>
    %cst = arith.constant dense<0.000000e+00> : vector<64x16xf32>
    %4 = tpu.matmul %3, %2, %cst {dimension_numbers = #tpu.dot_dimension_numbers<[1], [0], [0], [1], [0, 0, 1, 1], [], []>} : vector<64x16xbf16>, vector<16x16xbf16>, vector<64x16xf32> -> vector<64x16xf32>
    %5 = arith.truncf %4 : vector<64x16xf32> to vector<64x16xbf16>
    %c0_4 = arith.constant 0 : index
    %c0_5 = arith.constant 0 : index
    %6 = vector.load %arg7[%c0_4, %c0_5] : memref<16x64xbf16, #tpu.memory_space<vmem>>, vector<16x64xbf16>
    %cst_6 = arith.constant dense<0.000000e+00> : vector<64x64xf32>
    %7 = tpu.matmul %5, %6, %cst_6 {dimension_numbers = #tpu.dot_dimension_numbers<[1], [0], [0], [1], [0, 0, 1, 1], [], []>} : vector<64x16xbf16>, vector<16x64xbf16>, vector<64x64xf32> -> vector<64x64xf32>
    %8 = arith.index_cast %arg0 : i32 to index
    %9 = memref.load %arg4[%8] : memref<6xf32, #tpu.memory_space<smem>>
    %cst_7 = arith.constant 1.000000e+00 : f32
    %10 = arith.divf %cst_7, %9 : f32
    %c0_8 = arith.constant 0 : index
    %c0_9 = arith.constant 0 : index
    %11 = vector.load %arg8[%c0_8, %c0_9] : memref<64x1xf32, #tpu.memory_space<vmem>>, vector<64x1xf32>
    %c0_10 = arith.constant 0 : index
    %c0_11 = arith.constant 0 : index
    %12 = vector.load %arg9[%c0_10, %c0_11] : memref<1x64xf32, #tpu.memory_space<vmem>>, vector<1x64xf32>
    %13 = vector.broadcast %11 : vector<64x1xf32> to vector<64x64xf32>
    %14 = vector.broadcast %12 : vector<1x64xf32> to vector<64x64xf32>
    %15 = arith.mulf %13, %14 : vector<64x64xf32>
    %16 = vector.broadcast %10 : f32 to vector<64x64xf32>
    %17 = arith.mulf %16, %7 : vector<64x64xf32>
    %18 = arith.index_cast %arg0 : i32 to index
    %19 = memref.load %arg3[%18] : memref<6xf32, #tpu.memory_space<smem>>
    %20 = arith.mulf %19, %10 : f32
    %21 = vector.broadcast %20 : f32 to vector<64x64xf32>
    %22 = arith.mulf %21, %15 : vector<64x64xf32>
    %23 = arith.subf %17, %22 : vector<64x64xf32>
    %c0_12 = arith.constant 0 : index
    %c0_13 = arith.constant 0 : index
    %c0_14 = arith.constant 0 : index
    %24 = vector.load %arg10[%c0_12, %c0_13, %c0_14] : memref<1x64x64xf32, #tpu.memory_space<vmem>>, vector<1x64x64xf32>
    %25 = vector.shape_cast %24 : vector<1x64x64xf32> to vector<64x64xf32>
    %26 = vector.shape_cast %23 : vector<64x64xf32> to vector<1x64x64xf32>
    tpu.vector_store %arg10[%c0_12, %c0_13, %c0_14], %26 {strides = array<i32>} : memref<1x64x64xf32, #tpu.memory_space<vmem>>, vector<1x64x64xf32>,
    return
  }
  func.func @transform_0(%arg0: i32, %arg1: i32, %arg2: i32) -> i32 {
    %c0_i32 = arith.constant 0 : i32
    %c0_i32_0 = arith.constant 0 : i32
    return %c0_i32 : i32
  }
  func.func @transform_1(%arg0: i32, %arg1: i32, %arg2: i32) -> i32 {
    %c0_i32 = arith.constant 0 : i32
    %c0_i32_0 = arith.constant 0 : i32
    return %c0_i32 : i32
  }
  func.func @transform_2(%arg0: i32, %arg1: i32, %arg2: i32) -> (i32, i32, i32) {
    %c0_i32 = arith.constant 0 : i32
    %c0_i32_0 = arith.constant 0 : i32
    return %arg0, %c0_i32, %arg2 : i32, i32, i32
  }
  func.func @transform_3(%arg0: i32, %arg1: i32, %arg2: i32) -> (i32, i32) {
    %c0_i32 = arith.constant 0 : i32
    %c0_i32_0 = arith.constant 0 : i32
    return %arg1, %c0_i32 : i32, i32
  }
  func.func @transform_4(%arg0: i32, %arg1: i32, %arg2: i32) -> (i32, i32) {
    %c0_i32 = arith.constant 0 : i32
    %c0_i32_0 = arith.constant 0 : i32
    return %arg2, %c0_i32 : i32, i32
  }
  func.func @transform_5(%arg0: i32, %arg1: i32, %arg2: i32) -> (i32, i32) {
    %c0_i32 = arith.constant 0 : i32
    %c0_i32_0 = arith.constant 0 : i32
    return %arg1, %c0_i32 : i32, i32
  }
  func.func @transform_6(%arg0: i32, %arg1: i32, %arg2: i32) -> (i32, i32) {
    %c0_i32 = arith.constant 0 : i32
    %c0_i32_0 = arith.constant 0 : i32
    %c0_i32_1 = arith.constant 0 : i32
    return %c0_i32, %c0_i32_0 : i32, i32
  }
  func.func @transform_7(%arg0: i32, %arg1: i32, %arg2: i32) -> (i32, i32, i32) {
    %c0_i32 = arith.constant 0 : i32
    %c0_i32_0 = arith.constant 0 : i32
    return %arg0, %arg1, %c0_i32 : i32, i32, i32
  }
}

</mosaic_0001>

<llo_original>
// kernel: tile.14
$region0: #{tile.14}
  %s0 = inlined_call_operand.vmem [shape: f32[2,3], index: 0, kind: input, shape index: {}]
  %s1 = inlined_call_operand.vmem [shape: f32[6], index: 1, kind: output, shape index: {}]
  $region1: #{tile.14} parent=0
    #allocation0 [shape = 'u8[4096]{0}', space=vmem, size = 0x1000, scoped, tag = 'scoped mem for output reshape']
    #allocation1 [shape = 'u8[4096]{0}', space=vmem, size = 0x1000, scoped, tag = 'scoped mem for input reshape']
    %s3 = ssub.s32 4, 1
    %v4 = vld [vmem:[%s0] sm:%s3]
    %5 = vst [vmem:[#allocation1] sm:%s3] %v4
    %v6 = vld [vmem:[#allocation1] sm:$0x1]
    %vm7 = vcmask 23552
    %8 = vst.msk [vmem:[#allocation0] sm:$0x1] %vm7, %v6
    %s9 = scalar_lea.vmem [#allocation1], 1
    %v10 = vld [vmem:[%s9] sm:$0x1]
    %11 = vrot.lane.b32.xlu0 %v10, 3
    %v12 = vpop.permute.xlu0 %11
    %vm13 = vcmask 48152
    %14 = vst.msk [vmem:[#allocation0] sm:$0x1] %vm13, %v12
    %s16 = ssub.s32 2, 1
    %v17 = vld [vmem:[#allocation0] sm:%s16]
    %s19 = ssub.s32 2, 1
    %20 = vst [vmem:[%s1] sm:%s19] %v17

// kernel: tile.13
$region0: #{tile.13}
  #allocation0 [shape = 's32[1]{0}', space=sflag, size = 0x4, scoped, tag = 'scoped memory for tile.13']
  %s0 = inlined_call_operand.vmem [shape: f32[3], index: 0, kind: input, shape index: {}]
  %s1 = inlined_call_operand.vmem [shape: f32[2,3], index: 1, kind: output, shape index: {}]
  // Predicated region
  $region2: #{tile.13} parent=0 // pred_check
    _
  $region3: #{tile.13} parent=0 // pred_check_branch
    %3 = sbr.rel (0) target = $region5
  $region4: #{tile.13} parent=0 // pred_region
    _
  $region5: #{tile.13} parent=0 // pred_fallthru
    _
  %v4 = vld [vmem:[%s0] ss:$0 sm:$0xff]
  %5 = vst [vmem:[%s1] sm:$0x3] %v4

// kernel: _resize_bucket.1
$region0: #{_resize_bucket.1}
  #allocation0 [shape = 'u32[]', space=smem, size = 0x4, offset = 0x4, fixed_abs, tag = 'smem constant byte address 0x4 - core index']
  #allocation1 [shape = 'u32[72,128]{1,0:T(1,128)}', space=vmem, size = 0x9000, scoped, tag = 'internal scratch']
  %s0 = inlined_call_operand.vmem [shape: f32[6], index: 0, kind: input, shape index: {}]
  %s1 = inlined_call_operand.vmem [shape: f32[6], index: 1, kind: input, shape index: {}]
  %s2 = inlined_call_operand.vmem [shape: f32[6,16,16], index: 2, kind: input, shape index: {}]
  %s3 = inlined_call_operand.vmem [shape: bf16[64,16], index: 3, kind: input, shape index: {}]
  %s4 = inlined_call_operand.vmem [shape: bf16[16,64], index: 4, kind: input, shape index: {}]
  %s5 = inlined_call_operand.vmem [shape: f32[64,1], index: 5, kind: input, shape index: {}]
  %s6 = inlined_call_operand.vmem [shape: f32[1,64], index: 6, kind: input, shape index: {}]
  %s7 = inlined_call_operand.hbm [shape: f32[6,64,64], index: 7, kind: output, shape index: {}]
  %s8 = sld [smem:[#allocation0]]
  $region69: #{_resize_bucket.1} parent=0
    _
  %s10 = ssub.s32 1, %s8
  %s11 = scalar_select 0, %s10, %s8
  $region1: #{_resize_bucket.1} parent=0
    #allocation2 [shape = 'u8[512]{0}', space=smem, size = 0x200, scoped, tag = 'input window, operand 0, single buffered']
    #allocation3 [shape = 's32[2]{0}', space=sflag, size = 0x8, scoped, tag = 'scoped memory for _resize_bucket.1']
    #allocation4 [shape = 's32[2]{0}', space=sflag, size = 0x8, scoped, tag = 'scoped memory for _resize_bucket.1']
    #allocation5 [shape = 'u8[512]{0}', space=smem, size = 0x200, scoped, tag = 'input window, operand 1, single buffered']
    #allocation6 [shape = 's32[1]{0}', space=sflag, size = 0x4, scoped, tag = 'scoped memory for _resize_bucket.1']
    #allocation7 [shape = 'u8[65536]{0}', space=vmem, size = 0x10000, scoped, tag = 'output window, operand 0']
    %12 = vsyncpa [#allocation4], 0
    %13 = vsyncpa [#allocation6], 0
    %14 = vsyncpa [#allocation3], 0
    %s15 = scalar_lea.sflag [#allocation3], 1
    %16 = vsyncpa %s15, 0
    loop: start=0, step=1, limit=8
    $region2: #{_resize_bucket.1} parent=1 // loop_pre_header
      _
    $region3: #{_resize_bucket.1} parent=1 // loop_header
      %s18 = sphi 0, %s22
      %p19 = scmp.ge.s32.totalorder %s18, 8
      %s25 = sphi 0, %s44
      %s26 = sphi 0, %s40
      %s27 = sphi 0, %s36
      %s28 = sphi 0, %s25
      %s29 = sphi 0, %s26
      %s30 = sphi 0, %s27
      %s31 = sphi 0, %s28
      %s32 = sphi 0, %s29
      %s33 = sphi 0, %s30
      %s45 = sphi 0, %s45
      %s47 = sphi 0, %s45
      %s48 = sphi 0, %s47
      %s62 = sphi 0, %s48
      %s66 = sphi 0, %s66
      %s68 = sphi 0, %s66
      %s69 = sphi 0, %s68
      %s83 = sphi 0, %s69
      %s91 = sphi 0, %s93
      %s94 = sphi 0, %s91
      %s95 = sphi 0, %s94
      %s111 = sphi 0, %s95
      %s117 = sphi 0, %s119
      %s120 = sphi 0, %s117
      %s121 = sphi 0, %s120
      %s137 = sphi 0, %s121
      %s143 = sphi 0, %s145
      %s146 = sphi 0, %s143
      %s147 = sphi 0, %s146
      %s163 = sphi 0, %s147
      %s169 = sphi 0, %s171
      %s172 = sphi 0, %s169
      %s173 = sphi 0, %s172
      %s189 = sphi 0, %s173
      %s193 = sphi 0, %s193
      %s195 = sphi 0, %s193
      %s196 = sphi 0, %s195
      %s210 = sphi 0, %s196
      %s218 = sphi 0, %s220
      %s221 = sphi 0, %s218
      %s222 = sphi 0, %s221
      %s238 = sphi 0, %s222
    $region4: #{_resize_bucket.1} parent=1 // loop_header_branch
      %21 = sbr.rel (%p19) target = $region8
    $region5: #{_resize_bucket.1} parent=1 // loop_body
      %s23 = ssub.s32 %s18, 1
      %s24 = ssub.s32 %s18, 2
      %s34 = sadd.s32 1, %s27
      %p35 = scmp.ge.s32.totalorder %s34, 1
      %s36 = scalar_select %p35, 0, %s34
      %s37 = sadd.s32 1, %s26
      %s38 = scalar_select %p35, %s37, %s26
      %p39 = scmp.ge.s32.totalorder %s38, 1
      %s40 = scalar_select %p39, 0, %s38
      %s41 = sadd.s32 1, %s25
      %s42 = scalar_select %p39, %s41, %s25
      %p43 = scmp.ge.s32.totalorder %s42, 6
      %s44 = scalar_select %p43, 0, %s42
      %s46 = sadd.s32 %s45, 1
      %p49 = scmp.eq.s32.totalorder %s18, 5
      %p50 = scmp.ne.s32.totalorder %s45, %s47
      %p51 = scmp.eq.s32.totalorder %s18, 0
      %p52 = por %p50, %p51
      %p53 = scmp.ne.s32.totalorder %s45, %s47
      %p54 = scmp.eq.s32.totalorder %s23, 5
      %p55 = por %p53, %p54
      %p56 = scmp.ne.s32.totalorder %s47, %s48
      %p57 = scmp.eq.s32.totalorder %s23, 0
      %p58 = por %p56, %p57
      %p59 = scmp.ne.s32.totalorder %s47, %s48
      %p60 = scmp.eq.s32.totalorder %s24, 5
      %p61 = por %p59, %p60
      %p63 = scmp.ne.s32.totalorder %s48, %s62
      %p64 = scmp.eq.s32.totalorder %s24, 0
      %p65 = por %p63, %p64
      %s67 = sadd.s32 %s66, 1
      %p70 = scmp.eq.s32.totalorder %s18, 5
      %p71 = scmp.ne.s32.totalorder %s66, %s68
      %p72 = scmp.eq.s32.totalorder %s18, 0
      %p73 = por %p71, %p72
      %p74 = scmp.ne.s32.totalorder %s66, %s68
      %p75 = scmp.eq.s32.totalorder %s23, 5
      %p76 = por %p74, %p75
      %p77 = scmp.ne.s32.totalorder %s68, %s69
      %p78 = scmp.eq.s32.totalorder %s23, 0
      %p79 = por %p77, %p78
      %p80 = scmp.ne.s32.totalorder %s68, %s69
      %p81 = scmp.eq.s32.totalorder %s24, 5
      %p82 = por %p80, %p81
      %p84 = scmp.ne.s32.totalorder %s69, %s83
      %p85 = scmp.eq.s32.totalorder %s24, 0
      %p86 = por %p84, %p85
      %s87 = ssub.s32 %s25, %s44
      %s88 = ssub.s32 %s27, %s36
      %s89 = sor.u32 %s87, %s88
      %p90 = scmp.eq.s32.totalorder %s89, 0
      %s92 = sadd.s32 %s91, 1
      %s93 = scalar_select %p90, %s91, %s92
      %p96 = pneg %p90
      %p97 = scmp.eq.s32.totalorder %s18, 5
      %p98 = por %p96, %p97
      %p99 = scmp.ne.s32.totalorder %s91, %s94
      %p100 = scmp.eq.s32.totalorder %s18, 0
      %p101 = por %p99, %p100
      %p102 = scmp.ne.s32.totalorder %s91, %s94
      %p103 = scmp.eq.s32.totalorder %s23, 5
      %p104 = por %p102, %p103
      %p105 = scmp.ne.s32.totalorder %s94, %s95
      %p106 = scmp.eq.s32.totalorder %s23, 0
      %p107 = por %p105, %p106
      %p108 = scmp.ne.s32.totalorder %s94, %s95
      %p109 = scmp.eq.s32.totalorder %s24, 5
      %p110 = por %p108, %p109
      %p112 = scmp.ne.s32.totalorder %s95, %s111
      %p113 = scmp.eq.s32.totalorder %s24, 0
      %p114 = por %p112, %p113
      %s115 = ssub.s32 %s26, %s40
      %p116 = scmp.eq.s32.totalorder %s115, 0
      %s118 = sadd.s32 %s117, 1
      %s119 = scalar_select %p116, %s117, %s118
      %p122 = pneg %p116
      %p123 = scmp.eq.s32.totalorder %s18, 5
      %p124 = por %p122, %p123
      %p125 = scmp.ne.s32.totalorder %s117, %s120
      %p126 = scmp.eq.s32.totalorder %s18, 0
      %p127 = por %p125, %p126
      %p128 = scmp.ne.s32.totalorder %s117, %s120
      %p129 = scmp.eq.s32.totalorder %s23, 5
      %p130 = por %p128, %p129
      %p131 = scmp.ne.s32.totalorder %s120, %s121
      %p132 = scmp.eq.s32.totalorder %s23, 0
      %p133 = por %p131, %p132
      %p134 = scmp.ne.s32.totalorder %s120, %s121
      %p135 = scmp.eq.s32.totalorder %s24, 5
      %p136 = por %p134, %p135
      %p138 = scmp.ne.s32.totalorder %s121, %s137
      %p139 = scmp.eq.s32.totalorder %s24, 0
      %p140 = por %p138, %p139
      %s141 = ssub.s32 %s27, %s36
      %p142 = scmp.eq.s32.totalorder %s141, 0
      %s144 = sadd.s32 %s143, 1
      %s145 = scalar_select %p142, %s143, %s144
      %p148 = pneg %p142
      %p149 = scmp.eq.s32.totalorder %s18, 5
      %p150 = por %p148, %p149
      %p151 = scmp.ne.s32.totalorder %s143, %s146
      %p152 = scmp.eq.s32.totalorder %s18, 0
      %p153 = por %p151, %p152
      %p154 = scmp.ne.s32.totalorder %s143, %s146
      %p155 = scmp.eq.s32.totalorder %s23, 5
      %p156 = por %p154, %p155
      %p157 = scmp.ne.s32.totalorder %s146, %s147
      %p158 = scmp.eq.s32.totalorder %s23, 0
      %p159 = por %p157, %p158
      %p160 = scmp.ne.s32.totalorder %s146, %s147
      %p161 = scmp.eq.s32.totalorder %s24, 5
      %p162 = por %p160, %p161
      %p164 = scmp.ne.s32.totalorder %s147, %s163
      %p165 = scmp.eq.s32.totalorder %s24, 0
      %p166 = por %p164, %p165
      %s167 = ssub.s32 %s26, %s40
      %p168 = scmp.eq.s32.totalorder %s167, 0
      %s170 = sadd.s32 %s169, 1
      %s171 = scalar_select %p168, %s169, %s170
      %p174 = pneg %p168
      %p175 = scmp.eq.s32.totalorder %s18, 5
      %p176 = por %p174, %p175
      %p177 = scmp.ne.s32.totalorder %s169, %s172
      %p178 = scmp.eq.s32.totalorder %s18, 0
      %p179 = por %p177, %p178
      %p180 = scmp.ne.s32.totalorder %s169, %s172
      %p181 = scmp.eq.s32.totalorder %s23, 5
      %p182 = por %p180, %p181
      %p183 = scmp.ne.s32.totalorder %s172, %s173
      %p184 = scmp.eq.s32.totalorder %s23, 0
      %p185 = por %p183, %p184
      %p186 = scmp.ne.s32.totalorder %s172, %s173
      %p187 = scmp.eq.s32.totalorder %s24, 5
      %p188 = por %p186, %p187
      %p190 = scmp.ne.s32.totalorder %s173, %s189
      %p191 = scmp.eq.s32.totalorder %s24, 0
      %p192 = por %p190, %p191
      %s194 = sadd.s32 %s193, 1
      %p197 = scmp.eq.s32.totalorder %s18, 5
      %p198 = scmp.ne.s32.totalorder %s193, %s195
      %p199 = scmp.eq.s32.totalorder %s18, 0
      %p200 = por %p198, %p199
      %p201 = scmp.ne.s32.totalorder %s193, %s195
      %p202 = scmp.eq.s32.totalorder %s23, 5
      %p203 = por %p201, %p202
      %p204 = scmp.ne.s32.totalorder %s195, %s196
      %p205 = scmp.eq.s32.totalorder %s23, 0
      %p206 = por %p204, %p205
      %p207 = scmp.ne.s32.totalorder %s195, %s196
      %p208 = scmp.eq.s32.totalorder %s24, 5
      %p209 = por %p207, %p208
      %p211 = scmp.ne.s32.totalorder %s196, %s210
      %p212 = scmp.eq.s32.totalorder %s24, 0
      %p213 = por %p211, %p212
      %s214 = ssub.s32 %s25, %s44
      %s215 = ssub.s32 %s26, %s40
      %s216 = sor.u32 %s214, %s215
      %p217 = scmp.eq.s32.totalorder %s216, 0
      %s219 = sadd.s32 %s218, 1
      %s220 = scalar_select %p217, %s218, %s219
      %p223 = pneg %p217
      %p224 = scmp.eq.s32.totalorder %s18, 5
      %p225 = por %p223, %p224
      %p226 = scmp.ne.s32.totalorder %s218, %s221
      %p227 = scmp.eq.s32.totalorder %s18, 0
      %p228 = por %p226, %p227
      %p229 = scmp.ne.s32.totalorder %s218, %s221
      %p230 = scmp.eq.s32.totalorder %s23, 5
      %p231 = por %p229, %p230
      %p232 = scmp.ne.s32.totalorder %s221, %s222
      %p233 = scmp.eq.s32.totalorder %s23, 0
      %p234 = por %p232, %p233
      %p235 = scmp.ne.s32.totalorder %s221, %s222
      %p236 = scmp.eq.s32.totalorder %s24, 5
      %p237 = por %p235, %p236
      %p239 = scmp.ne.s32.totalorder %s222, %s238
      %p240 = scmp.eq.s32.totalorder %s24, 0
      %p241 = por %p239, %p240
      %p242 = scmp.le.s32.totalorder 1, %s18
      %p243 = scmp.lt.s32.totalorder %s18, 7
      %p244 = pnand %p242, %p243
      %p245 = pneg %p244
      // Predicated region
      $region9: #{_resize_bucket.1} parent=5 // pred_check
        _
      $region10: #{_resize_bucket.1} parent=5 // pred_check_branch
        %247 = sbr.rel (%p244) target = $region12
      $region11: #{_resize_bucket.1} parent=5 // pred_region
        %s248 = ssub.s32 %s18, 1
        // Predicated region
        $region13: #{_resize_bucket.1} parent=11 // pred_check
          %p249 = pneg %p58
        $region14: #{_resize_bucket.1} parent=11 // pred_check_branch
          %251 = sbr.rel (%p249) target = $region16
        $region15: #{_resize_bucket.1} parent=11 // pred_region
          %253 = vsyncadd [#allocation4], 0
          %s255 = sshll.u32 %s0, 4
          %s256 = int_to_ptr.vmem [resolvable:$true] %s255
          %258 = dma.vmem_to_smem %s256, 16, [#allocation2], [#allocation4]
        $region16: #{_resize_bucket.1} parent=11 // pred_fallthru
          _
        // Predicated region
        $region17: #{_resize_bucket.1} parent=11 // pred_check
          %p259 = pneg %p79
        $region18: #{_resize_bucket.1} parent=11 // pred_check_branch
          %261 = sbr.rel (%p259) target = $region20
        $region19: #{_resize_bucket.1} parent=11 // pred_region
          %263 = vsyncadd [#allocation6], 0
          %s265 = sshll.u32 %s1, 4
          %s266 = int_to_ptr.vmem [resolvable:$true] %s265
          %268 = dma.vmem_to_smem %s266, 16, [#allocation5], [#allocation6]
        $region20: #{_resize_bucket.1} parent=11 // pred_fallthru
          _
        // Predicated region
        $region21: #{_resize_bucket.1} parent=11 // pred_check
          %p269 = pneg %p133
        $region22: #{_resize_bucket.1} parent=11 // pred_check_branch
          %271 = sbr.rel (%p269) target = $region24
        $region23: #{_resize_bucket.1} parent=11 // pred_region
          %s272 = smul.u32 8, %s29
          %p273 = scmp.lt.s32.totalorder %s272, 7
          %s274 = scalar_select %p273, %s272, 7
          %s275 = smul.addr %s274, 4
          %s276 = scalar_lea.vmem %s3, %s275
          %s277 = smul.u32 8, %s29
        $region24: #{_resize_bucket.1} parent=11 // pred_fallthru
          _
        // Predicated region
        $region25: #{_resize_bucket.1} parent=11 // pred_check
          %p278 = pneg %p159
        $region26: #{_resize_bucket.1} parent=11 // pred_check_branch
          %280 = sbr.rel (%p278) target = $region28
        $region27: #{_resize_bucket.1} parent=11 // pred_region
          %s281 = smul.u32 2, %s30
          %p282 = scmp.lt.s32.totalorder %s281, 1
          %s283 = scalar_select %p282, %s281, 1
          %s284 = smul.addr %s283, 4
          %s285 = scalar_lea.vmem %s4, %s284
          %s286 = smul.u32 2, %s30
        $region28: #{_resize_bucket.1} parent=11 // pred_fallthru
          _
        // Predicated region
        $region29: #{_resize_bucket.1} parent=11 // pred_check
          %p287 = pneg %p185
        $region30: #{_resize_bucket.1} parent=11 // pred_check_branch
          %289 = sbr.rel (%p287) target = $region32
        $region31: #{_resize_bucket.1} parent=11 // pred_region
          %s290 = smul.u32 8, %s29
          %p291 = scmp.lt.s32.totalorder %s290, 7
          %s292 = scalar_select %p291, %s290, 7
          %s293 = smul.addr %s292, 8
          %s294 = scalar_lea.vmem %s5, %s293
          %s295 = smul.u32 8, %s29
        $region32: #{_resize_bucket.1} parent=11 // pred_fallthru
          _
        // Predicated region
        $region33: #{_resize_bucket.1} parent=11 // pred_check
          %p296 = pneg %p206
        $region34: #{_resize_bucket.1} parent=11 // pred_check_branch
          %298 = sbr.rel (%p296) target = $region36
        $region35: #{_resize_bucket.1} parent=11 // pred_region
          _
        $region36: #{_resize_bucket.1} parent=11 // pred_fallthru
          _
      $region12: #{_resize_bucket.1} parent=5 // pred_fallthru
        _
      %p299 = scmp.lt.s32.totalorder %s18, 6
      // Predicated region
      $region37: #{_resize_bucket.1} parent=5 // pred_check
        %p300 = pneg %p299
      $region38: #{_resize_bucket.1} parent=5 // pred_check_branch
        %302 = sbr.rel (%p300) target = $region40
      $region39: #{_resize_bucket.1} parent=5 // pred_region
        // Predicated region
        $region41: #{_resize_bucket.1} parent=39 // pred_check
          %p303 = pneg %p101
        $region42: #{_resize_bucket.1} parent=39 // pred_check_branch
          %305 = sbr.rel (%p303) target = $region44
        $region43: #{_resize_bucket.1} parent=39 // pred_region
          %p306 = scmp.lt.s32.totalorder %s25, 5
          %s307 = scalar_select %p306, %s25, 5
          %p308 = scmp.lt.s32.totalorder %s27, 0
          %s309 = scalar_select %p308, %s27, 0
          %s310 = smul.addr %s307, 2
          %s311 = sadd.s32 %s309, %s310
          %s312 = smul.addr %s311, 8
          %s313 = scalar_lea.vmem %s2, %s312
        $region44: #{_resize_bucket.1} parent=39 // pred_fallthru
          _
      $region40: #{_resize_bucket.1} parent=5 // pred_fallthru
        _
      %p314 = scmp.le.s32.totalorder 1, %s18
      %p315 = scmp.lt.s32.totalorder %s18, 7
      %p316 = pnand %p314, %p315
      %p317 = pneg %p316
      // Predicated region
      $region45: #{_resize_bucket.1} parent=5 // pred_check
        _
      $region46: #{_resize_bucket.1} parent=5 // pred_check_branch
        %319 = sbr.rel (%p316) target = $region48
      $region47: #{_resize_bucket.1} parent=5 // pred_region
        %s320 = ssub.s32 %s18, 1
        // Predicated region
        $region49: #{_resize_bucket.1} parent=47 // pred_check
          %p321 = pneg %p58
        $region50: #{_resize_bucket.1} parent=47 // pred_check_branch
          %323 = sbr.rel (%p321) target = $region52
        $region51: #{_resize_bucket.1} parent=47 // pred_region
          %325 = dma.done [#allocation4], 16
        $region52: #{_resize_bucket.1} parent=47 // pred_fallthru
          _
        // Predicated region
        $region53: #{_resize_bucket.1} parent=47 // pred_check
          %p326 = pneg %p79
        $region54: #{_resize_bucket.1} parent=47 // pred_check_branch
          %328 = sbr.rel (%p326) target = $region56
        $region55: #{_resize_bucket.1} parent=47 // pred_region
          %330 = dma.done [#allocation6], 16
        $region56: #{_resize_bucket.1} parent=47 // pred_fallthru
          _
        %331 = sfence
        %p332 = pneg %p58
        %p333 = pneg %p55
        %p334 = pneg %p79
        %p335 = pneg %p76
        %p336 = scmp.lt.s32.totalorder %s28, 5
        %s337 = scalar_select %p336, %s28, 5
        %p338 = scmp.lt.s32.totalorder %s30, 0
        %s339 = scalar_select %p338, %s30, 0
        %s340 = smul.addr %s337, 2
        %s341 = sadd.s32 %s339, %s340
        %s342 = smul.addr %s341, 8
        %s343 = scalar_lea.vmem %s2, %s342
        %p344 = pneg %p107
        %p345 = pneg %p104
        %s346 = smul.u32 8, %s29
        %p347 = scmp.lt.s32.totalorder %s346, 7
        %s348 = scalar_select %p347, %s346, 7
        %s349 = smul.addr %s348, 4
        %s350 = scalar_lea.vmem %s3, %s349
        %p351 = pneg %p133
        %p352 = pneg %p130
        %s353 = smul.u32 2, %s30
        %p354 = scmp.lt.s32.totalorder %s353, 1
        %s355 = scalar_select %p354, %s353, 1
        %s356 = smul.addr %s355, 4
        %s357 = scalar_lea.vmem %s4, %s356
        %p358 = pneg %p159
        %p359 = pneg %p156
        %s360 = smul.u32 8, %s29
        %p361 = scmp.lt.s32.totalorder %s360, 7
        %s362 = scalar_select %p361, %s360, 7
        %s363 = smul.addr %s362, 8
        %s364 = scalar_lea.vmem %s5, %s363
        %p365 = pneg %p185
        %p366 = pneg %p182
        %p367 = pneg %p206
        %p368 = pneg %p203
        %p369 = pneg %p234
        %p370 = pneg %p231
        %s371 = sand.u32 %s221, 1
        %s372 = scalar_lea.sflag [#allocation3], %s371
        %s373 = sand.u32 %s221, 1
        %s374 = smul.addr %s373, 64
        %s375 = scalar_lea.vmem [#allocation7], %s374
        %p376 = scmp.lt.s32.totalorder %s28, 5
        %s377 = scalar_select %p376, %s28, 5
        %p378 = scmp.lt.s32.totalorder %s30, 0
        %s379 = scalar_select %p378, %s30, 0
        %s380 = smul.addr %s377, 2
        %s381 = sadd.s32 %s379, %s380
        %s382 = smul.addr %s381, 8
        %s383 = scalar_lea.vmem %s2, %s382
        %s384 = smul.u32 8, %s29
        %p385 = scmp.lt.s32.totalorder %s384, 7
        %s386 = scalar_select %p385, %s384, 7
        %s387 = smul.addr %s386, 4
        %s388 = scalar_lea.vmem %s3, %s387
        %s389 = smul.u32 8, %s29
        %s390 = smul.u32 2, %s30
        %p391 = scmp.lt.s32.totalorder %s390, 1
        %s392 = scalar_select %p391, %s390, 1
        %s393 = smul.addr %s392, 4
        %s394 = scalar_lea.vmem %s4, %s393
        %s395 = smul.u32 2, %s30
        %s396 = smul.u32 8, %s29
        %p397 = scmp.lt.s32.totalorder %s396, 7
        %s398 = scalar_select %p397, %s396, 7
        %s399 = smul.addr %s398, 8
        %s400 = scalar_lea.vmem %s5, %s399
        %s401 = smul.u32 8, %s29
        %s402 = smul.u32 8, %s29
        %v404 = vld [vmem:[%s383] sm:$0xff]
        %v405 = vld [vmem:[%s383 + $0x8] sm:$0xff]
        %v406 = vpack.c.bf16 %v405, %v404
        %v407 = vld [vmem:[%s388] sm:$0xf]
        %v408 = vld [vmem:[%s388 + $0x4] sm:$0xf]
        %v409 = vld [vmem:[%s388 + $0x8] sm:$0xf]
        %v410 = vld [vmem:[%s388 + $0xc] sm:$0xf]
        %v411 = vld [vmem:[%s388 + $0x10] sm:$0xf]
        %v412 = vld [vmem:[%s388 + $0x14] sm:$0xf]
        %v413 = vld [vmem:[%s388 + $0x18] sm:$0xf]
        %v414 = vld [vmem:[%s388 + $0x1c] sm:$0xf]
        %v423 = vunpack.c.l.b16 %v407
        %v424 = vunpack.c.l.b16 %v408
        %v425 = vunpack.c.l.b16 %v409
        %v426 = vunpack.c.l.b16 %v410
        %v427 = vunpack.c.l.b16 %v411
        %v428 = vunpack.c.l.b16 %v412
        %v429 = vunpack.c.l.b16 %v413
        %v430 = vunpack.c.l.b16 %v414
        %v431 = vpack.c.b16 %v424, %v423
        %v432 = vpack.c.b16 %v426, %v425
        %v433 = vpack.c.b16 %v428, %v427
        %v434 = vpack.c.b16 %v430, %v429
        %vm435 = vcmask 130048
        %v437 = vsel %vm435, %v431, 0
        %v440 = vsel %vm435, %v432, 0
        %v443 = vsel %vm435, %v433, 0
        %v446 = vsel %vm435, %v434, 0
        %448 = vmatpush.bf16.msra.mxu0 0
        %449 = vmatpush.bf16.msra.mxu0 0
        %450 = vmatpush.bf16.msra.mxu0 0
        %451 = vmatpush.bf16.msra.mxu0 0
        %452 = vmatpush.bf16.msra.mxu0 0
        %453 = vmatpush.bf16.msra.mxu0 0
        %454 = vmatpush.bf16.msra.mxu0 0
        %455 = vmatpush.bf16.msra.mxu0 %v406
        %456 = vmatmul.bf16.gmra.mxu0 %v437
        %v457 = vpop.f32.mrf.mxu0
        %v458 = vadd.f32 0.0, %v457
        %v459 = vpop.f32.mrf.mxu0
        %v460 = vadd.f32 0.0, %v459
        %461 = vmatmul.bf16.gmra.mxu0 %v440
        %v462 = vpop.f32.mrf.mxu0
        %v463 = vadd.f32 0.0, %v462
        %v464 = vpop.f32.mrf.mxu0
        %v465 = vadd.f32 0.0, %v464
        %466 = vmatmul.bf16.gmra.mxu0 %v443
        %v467 = vpop.f32.mrf.mxu0
        %v468 = vadd.f32 0.0, %v467
        %v469 = vpop.f32.mrf.mxu0
        %v470 = vadd.f32 0.0, %v469
        %471 = vmatmul.bf16.gmra.mxu0 %v446
        %v472 = vpop.f32.mrf.mxu0
        %v473 = vadd.f32 0.0, %v472
        %v474 = vpop.f32.mrf.mxu0
        %v475 = vadd.f32 0.0, %v474
        %476 = vdwg.mxu0
        %v477 = vpack.c.bf16 %v460, %v458
        %v478 = vpack.c.bf16 %v465, %v463
        %v479 = vpack.c.bf16 %v470, %v468
        %v480 = vpack.c.bf16 %v475, %v473
        %v481 = vld [vmem:[%s394] sm:$0xf]
        %v482 = vld [vmem:[%s394 + $0x4] sm:$0xf]
        %v485 = vunpack.c.l.b16 %v481
        %v486 = vunpack.c.l.b16 %v482
        %v487 = vpack.c.b16 %v486, %v485
        %v490 = vsel %vm435, %v477, 0
        %v493 = vsel %vm435, %v478, 0
        %v496 = vsel %vm435, %v479, 0
        %v499 = vsel %vm435, %v480, 0
        %501 = vmatpush.bf16.msra.mxu0 0
        %502 = vmatpush.bf16.msra.mxu0 0
        %503 = vmatpush.bf16.msra.mxu0 0
        %504 = vmatpush.bf16.msra.mxu0 0
        %505 = vmatpush.bf16.msra.mxu0 0
        %506 = vmatpush.bf16.msra.mxu0 0
        %507 = vmatpush.bf16.msra.mxu0 0
        %508 = vmatpush.bf16.msra.mxu0 %v487
        %509 = vmatmul.bf16.gmra.mxu0 %v490
        %v510 = vpop.f32.mrf.mxu0
        %v511 = vadd.f32 0.0, %v510
        %v512 = vpop.f32.mrf.mxu0
        %v513 = vadd.f32 0.0, %v512
        %514 = vmatmul.bf16.gmra.mxu0 %v493
        %v515 = vpop.f32.mrf.mxu0
        %v516 = vadd.f32 0.0, %v515
        %v517 = vpop.f32.mrf.mxu0
        %v518 = vadd.f32 0.0, %v517
        %519 = vmatmul.bf16.gmra.mxu0 %v496
        %v520 = vpop.f32.mrf.mxu0
        %v521 = vadd.f32 0.0, %v520
        %v522 = vpop.f32.mrf.mxu0
        %v523 = vadd.f32 0.0, %v522
        %524 = vmatmul.bf16.gmra.mxu0 %v499
        %v525 = vpop.f32.mrf.mxu0
        %v526 = vadd.f32 0.0, %v525
        %v527 = vpop.f32.mrf.mxu0
        %v528 = vadd.f32 0.0, %v527
        %529 = vdwg.mxu0
        %s530 = sld [smem:[#allocation5 + %s28]]
        %v531 = vstv %s530
        %v532 = vrcp.pop %v531
        %v533 = vmul.f32 %v531, %v532
        %v534 = vsub.f32 1.0, %v533
        %v535 = vmul.f32 %v532, %v534
        %v536 = vadd.f32 %v532, %v535
        %vm537 = vweird.f32 %v531
        %vm538 = vweird.f32 %v532
        %vm539 = vmor %vm537, %vm538
        %v540 = vsel %vm539, %v532, %v536
        %v541 = vand.u32 2147483647, %v531
        %vm542 = vcmp.eq.f32.partialorder %v541, 8.507059e+37
        %v543 = vand.u32 %v531, 2147483648
        %v544 = vor.u32 1.1754944e-38, %v543
        %v545 = vsel %vm542, %v544, %v540
        %s546 = vtos %v545
        %v547 = vld [vmem:[%s400] sm:$0xff]
        %v548 = vld [vmem:[%s400 + $0x8] sm:$0xff]
        %v549 = vld [vmem:[%s400 + $0x10] sm:$0xff]
        %v550 = vld [vmem:[%s400 + $0x18] sm:$0xff]
        %v551 = vld [vmem:[%s400 + $0x20] sm:$0xff]
        %v552 = vld [vmem:[%s400 + $0x28] sm:$0xff]
        %v553 = vld [vmem:[%s400 + $0x30] sm:$0xff]
        %v554 = vld [vmem:[%s400 + $0x38] sm:$0xff]
        %v555 = vld [vmem:[%s6] sm:$0x1]
        %557 = vset.pattern.permute.xlu0 0
        %558 = vperm.xlu0 %557, %v547
        %v559 = vpop.permute.xlu0 %558
        %562 = vset.pattern.permute.xlu0 0
        %563 = vperm.xlu0 %562, %v548
        %v564 = vpop.permute.xlu0 %563
        %567 = vset.pattern.permute.xlu0 0
        %568 = vperm.xlu0 %567, %v549
        %v569 = vpop.permute.xlu0 %568
        %572 = vset.pattern.permute.xlu0 0
        %573 = vperm.xlu0 %572, %v550
        %v574 = vpop.permute.xlu0 %573
        %577 = vset.pattern.permute.xlu0 0
        %578 = vperm.xlu0 %577, %v551
        %v579 = vpop.permute.xlu0 %578
        %582 = vset.pattern.permute.xlu0 0
        %583 = vperm.xlu0 %582, %v552
        %v584 = vpop.permute.xlu0 %583
        %587 = vset.pattern.permute.xlu0 0
        %588 = vperm.xlu0 %587, %v553
        %v589 = vpop.permute.xlu0 %588
        %592 = vset.pattern.permute.xlu0 0
        %593 = vperm.xlu0 %592, %v554
        %v594 = vpop.permute.xlu0 %593
        %v597 = vperm.slane %v555, 0
        %v599 = vmul.f32 %v559, %v597
        %v600 = vmul.f32 %v564, %v597
        %v601 = vmul.f32 %v569, %v597
        %v602 = vmul.f32 %v574, %v597
        %v603 = vmul.f32 %v579, %v597
        %v604 = vmul.f32 %v584, %v597
        %v605 = vmul.f32 %v589, %v597
        %v606 = vmul.f32 %v594, %v597
        %v607 = vstv %s546
        %v608 = vmul.f32 %v607, %v511
        %v609 = vmul.f32 %v607, %v513
        %v610 = vmul.f32 %v607, %v516
        %v611 = vmul.f32 %v607, %v518
        %v612 = vmul.f32 %v607, %v521
        %v613 = vmul.f32 %v607, %v523
        %v614 = vmul.f32 %v607, %v526
        %v615 = vmul.f32 %v607, %v528
        %s616 = sld [smem:[#allocation2 + %s28]]
        %s617 = smul.f32 %s616, %s546
        %v618 = vstv %s617
        %v619 = vmul.f32 %v618, %v599
        %v620 = vmul.f32 %v618, %v600
        %v621 = vmul.f32 %v618, %v601
        %v622 = vmul.f32 %v618, %v602
        %v623 = vmul.f32 %v618, %v603
        %v624 = vmul.f32 %v618, %v604
        %v625 = vmul.f32 %v618, %v605
        %v626 = vmul.f32 %v618, %v606
        %v627 = vsub.f32 %v608, %v619
        %v628 = vsub.f32 %v609, %v620
        %v629 = vsub.f32 %v610, %v621
        %v630 = vsub.f32 %v611, %v622
        %v631 = vsub.f32 %v612, %v623
        %v632 = vsub.f32 %v613, %v624
        %v633 = vsub.f32 %v614, %v625
        %v634 = vsub.f32 %v615, %v626
        %vm635 = vcmask 523264
        %636 = vst.msk [vmem:[%s375] sm:$0xff] %vm635, %v627
        %637 = vst.msk [vmem:[%s375 + $0x8] sm:$0xff] %vm635, %v628
        %638 = vst.msk [vmem:[%s375 + $0x10] sm:$0xff] %vm635, %v629
        %639 = vst.msk [vmem:[%s375 + $0x18] sm:$0xff] %vm635, %v630
        %640 = vst.msk [vmem:[%s375 + $0x20] sm:$0xff] %vm635, %v631
        %641 = vst.msk [vmem:[%s375 + $0x28] sm:$0xff] %vm635, %v632
        %642 = vst.msk [vmem:[%s375 + $0x30] sm:$0xff] %vm635, %v633
        %643 = vst.msk [vmem:[%s375 + $0x38] sm:$0xff] %vm635, %v634
        %s644 = sand.u32 %s221, 1
        %s645 = scalar_lea.sflag [#allocation3], %s644
        %s646 = sand.u32 %s221, 1
        %s647 = smul.addr %s646, 64
        %s648 = scalar_lea.vmem [#allocation7], %s647
        // Predicated region
        $region57: #{_resize_bucket.1} parent=47 // pred_check
          %p649 = pneg %p231
        $region58: #{_resize_bucket.1} parent=47 // pred_check_branch
          %651 = sbr.rel (%p649) target = $region60
        $region59: #{_resize_bucket.1} parent=47 // pred_region
          %s652 = smul.u32 8, %s29
          %654 = vsyncadd %s645, 0
          %s655 = smul.addr %s28, 8
          %s656 = sadd.s32 %s652, %s655
          %s657 = smul.addr %s656, 8
          %s658 = scalar_lea.hbm %s7, %s657
          %s659 = sshll.u32 %s648, 4
          %s660 = int_to_ptr.vmem [resolvable:$true] %s659
          %s661 = sshll.u32 %s658, 4
          %s662 = int_to_ptr.hbm [resolvable:$true] %s661
          %667 = dma.vmem_to_hbm [thread:$0]  %s660, 1024, %s662, %s645, 128, 128, 8
        $region60: #{_resize_bucket.1} parent=47 // pred_fallthru
          _
      $region48: #{_resize_bucket.1} parent=5 // pred_fallthru
        _
      %p668 = scmp.le.s32.totalorder 2, %s18
      // Predicated region
      $region61: #{_resize_bucket.1} parent=5 // pred_check
        %p669 = pneg %p668
      $region62: #{_resize_bucket.1} parent=5 // pred_check_branch
        %671 = sbr.rel (%p669) target = $region64
      $region63: #{_resize_bucket.1} parent=5 // pred_region
        %s672 = ssub.s32 %s18, 2
        // Predicated region
        $region65: #{_resize_bucket.1} parent=63 // pred_check
          %p673 = pneg %p237
        $region66: #{_resize_bucket.1} parent=63 // pred_check_branch
          %675 = sbr.rel (%p673) target = $region68
        $region67: #{_resize_bucket.1} parent=63 // pred_region
          %s676 = sand.u32 %s222, 1
          %s677 = scalar_lea.sflag [#allocation3], %s676
          %s678 = sand.u32 %s222, 1
          %s679 = smul.addr %s678, 64
          %s680 = scalar_lea.vmem [#allocation7], %s679
          %682 = dma.done %s677, 1024
        $region68: #{_resize_bucket.1} parent=63 // pred_fallthru
          _
      $region64: #{_resize_bucket.1} parent=5 // pred_fallthru
        _
    $region6: #{_resize_bucket.1} parent=1 // loop_footer
      %s22 = sadd.s32 1, %s18
    $region7: #{_resize_bucket.1} parent=1 // loop_footer_branch
      %17 = sbr.rel target = $region3
    $region8: #{_resize_bucket.1} parent=1 // loop_exit
      _
    %683 = vsyncpa [#allocation3], 1
    %s684 = scalar_lea.sflag [#allocation3], 1
    %685 = vsyncpa %s684, 1
    %686 = vsyncpa [#allocation4], 1
    %s687 = scalar_lea.sflag [#allocation4], 1
    %688 = vsyncpa %s687, 1
    %689 = vsyncpa [#allocation6], 1

</llo_original>
